<compile_context>
chip_gen: v7x
topology: tpu7x:2x2x1
jax: 0.10.0
libtpu: 0.0.40
codegen_flags: <defaults>
</compile_context>

<pallas_src>
import jax
import jax.numpy as jnp
from jax.experimental import pallas as pl
from jax.experimental.pallas import tpu as pltpu

# MLP sizes of circleModel: 2 -> 10 -> 10 -> 1
IN_F, H1_F, H2_F, OUT_F = 2, 10, 10, 1
LANES = 128

# Flat (row-major, PyTorch param layout) offsets into the 1-D SMEM param array:
#   W1[j, i] -> W1_OFF + j*IN_F + i      b1[j] -> B1_OFF + j
#   W2[j, k] -> W2_OFF + j*H1_F + k      b2[j] -> B2_OFF + j
#   W3[0, k] -> W3_OFF + k               b3[0] -> B3_OFF
W1_OFF = 0
B1_OFF = W1_OFF + H1_F * IN_F            # 20
W2_OFF = B1_OFF + H1_F                   # 30
B2_OFF = W2_OFF + H2_F * H1_F            # 130
W3_OFF = B2_OFF + H2_F                   # 140
B3_OFF = W3_OFF + H2_F                   # 150
N_PARAMS = B3_OFF + OUT_F                # 151


def _round_up(x, m):
    return ((x + m - 1) // m) * m


def mlp_kernel(p_ref, x_ref, o_ref):
    """One dense batch tile.

    p_ref : (N_PARAMS,) f32 in SMEM  -- weights read as scalars (scalar splats,
                                        no XLU lane/sublane broadcasts).
    x_ref : (2, TNS, 128) f32 in VMEM -- batch on (sublane, lane), fully dense.
    o_ref : (TNS, 128)    f32 in VMEM -- lane- and sublane-dense store.
    """
    x0 = x_ref[0]                                    # (TNS, 128) feature 0
    x1 = x_ref[1]                                    # (TNS, 128) feature 1

    # ---- layer 1 (2 -> 10): per-unit dense FMAs with scalar weights ----
    h1 = []
    for j in range(H1_F):
        a = (x0 * p_ref[W1_OFF + j * IN_F + 0]
             + x1 * p_ref[W1_OFF + j * IN_F + 1]
             + p_ref[B1_OFF + j])
        h1.append(jnp.maximum(a, 0.0))               # (TNS, 128)

    # ---- layer 2 (10 -> 10): unrolled scalar-weight FMAs over K = 10 ----
    h2 = []
    for j in range(H2_F):
        acc = h1[0] * p_ref[W2_OFF + j * H1_F + 0]
        for k in range(1, H1_F):
            acc = acc + h1[k] * p_ref[W2_OFF + j * H1_F + k]
        h2.append(jnp.maximum(acc + p_ref[B2_OFF + j], 0.0))

    # ---- layer 3 (10 -> 1): scalar-weight FMA accumulation (no XLU reduce) ----
    out = h2[0] * p_ref[W3_OFF + 0]
    for k in range(1, H2_F):
        out = out + h2[k] * p_ref[W3_OFF + k]
    o_ref[...] = (out + p_ref[B3_OFF]).astype(o_ref.dtype)


def pack_params(params):
    """Flatten PyTorch-layout params (W:(out,in), b:(out,)) into one 1-D f32 array."""
    w1, b1, w2, b2, w3, b3 = params
    return jnp.concatenate([
        w1.reshape(-1), b1.reshape(-1),
        w2.reshape(-1), b2.reshape(-1),
        w3.reshape(-1), b3.reshape(-1),
    ]).astype(jnp.float32)


def _pick_block_rows(r, block_rows):
    """Rows (of 128 samples) per grid step: multiple of 8, >=2 tiles for big batches."""
    br = _round_up(min(block_rows, _round_up(r, 8)), 8)
    # v7x megacore: if everything would land in a single tile but the batch is
    # sizable, split into two tiles so ("parallel",) shards across both TCs.
    if _round_up(r, br) == br and r >= 16:
        br = _round_up(-(-r // 2), 8)
    return br


def circle_model_forward(x, params, *, block_rows=256):
    """x: (N, 2) f32 (PyTorch layout). Returns logits of shape (N, 1).

    block_rows rows of 128 samples per grid step (default 256 -> 32768 samples,
    ~384 KiB double-buffered VMEM: trivial on v5e/v6e/v7x).
    """
    n = x.shape[0]
    r = -(-n // LANES)                                # number of 128-sample rows
    br = _pick_block_rows(r, block_rows)
    r_pad = _round_up(r, br)
    n_pad = r_pad * LANES
    grid = (r_pad // br,)

    # Host-side layout plumbing: feature-major + batch folded onto (sublane, lane).
    # (Ideally x would be produced feature-major upstream; here we pay one small
    # pad+transpose since the kernel itself only moves 12 B/sample.)
    x_t = jnp.zeros((IN_F, n_pad), jnp.float32).at[:, :n].set(x.astype(jnp.float32).T)
    x3 = x_t.reshape(IN_F, r_pad, LANES)
    p_flat = pack_params(params)

    flops = 2 * n_pad * (IN_F * H1_F + H1_F * H2_F + H2_F * OUT_F)
    bytes_accessed = 4 * ((IN_F + OUT_F) * n_pad + N_PARAMS)

    out2d = pl.pallas_call(
        mlp_kernel,
        out_shape=jax.ShapeDtypeStruct((r_pad, LANES), jnp.float32),
        grid=grid,
        in_specs=[
            # Params: whole 1-D array resident in SMEM, read as scalars.
            pl.BlockSpec(memory_space=pltpu.MemorySpace.SMEM),
            # Dense batch tile: (2, br, 128), double-buffered by Pallas.
            pl.BlockSpec((IN_F, br, LANES), lambda i: (0, i, 0)),
        ],
        out_specs=pl.BlockSpec((br, LANES), lambda i: (i, 0)),
        compiler_params=pltpu.CompilerParams(
            dimension_semantics=("parallel",),         # megacore split on v7x
            vmem_limit_bytes=32 * 1024 * 1024,
        ),
        cost_estimate=pl.CostEstimate(
            flops=flops, transcendentals=0, bytes_accessed=bytes_accessed),
    )(p_flat, x3)

    # Back to PyTorch layout (N, 1); padded tail samples are sliced off.
    return out2d.reshape(n_pad, 1)[:n]


def init_params(key):
    """PyTorch-style init: W ~ U(-1/sqrt(fan_in), +1/sqrt(fan_in)), W:(out,in), b:(out,)."""
    def linear(key, fan_in, fan_out):
        kw, kb = jax.random.split(key)
        bound = 1.0 / jnp.sqrt(jnp.float32(fan_in))
        w = jax.random.uniform(kw, (fan_out, fan_in), jnp.float32, -bound, bound)
        b = jax.random.uniform(kb, (fan_out,), jnp.float32, -bound, bound)
        return w, b

    k1, k2, k3 = jax.random.split(key, 3)
    w1, b1 = linear(k1, IN_F, H1_F)
    w2, b2 = linear(k2, H1_F, H2_F)
    w3, b3 = linear(k3, H2_F, OUT_F)
    return (w1, b1, w2, b2, w3, b3)


def reference_forward(x, params):
    w1, b1, w2, b2, w3, b3 = params
    h = jnp.maximum(x @ w1.T + b1, 0.0)
    h = jnp.maximum(h @ w2.T + b2, 0.0)
    return h @ w3.T + b3


if __name__ == "__main__":
    key = jax.random.PRNGKey(0)
    k_params, k_x, k_x2 = jax.random.split(key, 3)
    params = init_params(k_params)

    # Small batch of 2-D points (like the sklearn make_circles dataset).
    x = jax.random.normal(k_x, (8, 2), jnp.float32)
    out = jax.block_until_ready(circle_model_forward(x, params))
    ref = reference_forward(x, params)
    assert out.shape == (8, 1)
    assert jnp.allclose(out, ref, atol=1e-4, rtol=1e-4)

    # Multi-tile path: grid > 1, padding/unpadding, dense (sublane x lane) layout.
    x2 = jax.random.normal(k_x2, (1200, 2), jnp.float32)
    out2 = jax.block_until_ready(circle_model_forward(x2, params, block_rows=8))
    ref2 = reference_forward(x2, params)
    assert out2.shape == (1200, 1)
    assert jnp.allclose(out2, ref2, atol=1e-4, rtol=1e-4)

    print("KERNEL_OK")
</pallas_src>

<mosaic_0001>
module attributes {stable_mosaic.version = 11 : i64} {
  func.func @mlp_kernel(%arg0: i32, %arg1: memref<151xf32, #tpu.memory_space<smem>>, %arg2: memref<2x8x128xf32, #tpu.memory_space<vmem>>, %arg3: memref<8x128xf32, #tpu.memory_space<vmem>>) attributes {dimension_semantics = [#tpu.dimension_semantics<parallel>], iteration_bounds = array<i64: 1>, scalar_prefetch = 0 : i64, scratch_operands = 0 : i64, tpu.core_type = #tpu.core_type<tc>, window_params = [{transform_indices = @transform_0, window_bounds = array<i64: 151>}, {transform_indices = @transform_1, window_bounds = array<i64: 2, 8, 128>}, {transform_indices = @transform_2, window_bounds = array<i64: 8, 128>}]} {
    %c0 = arith.constant 0 : index
    %c0_0 = arith.constant 0 : index
    %c0_1 = arith.constant 0 : index
    %0 = vector.load %arg2[%c0, %c0_0, %c0_1] : memref<2x8x128xf32, #tpu.memory_space<vmem>>, vector<1x8x128xf32>
    %1 = vector.shape_cast %0 : vector<1x8x128xf32> to vector<8x128xf32>
    %c1 = arith.constant 1 : index
    %c0_2 = arith.constant 0 : index
    %c0_3 = arith.constant 0 : index
    %2 = vector.load %arg2[%c1, %c0_2, %c0_3] : memref<2x8x128xf32, #tpu.memory_space<vmem>>, vector<1x8x128xf32>
    %3 = vector.shape_cast %2 : vector<1x8x128xf32> to vector<8x128xf32>
    %c0_4 = arith.constant 0 : index
    %4 = memref.load %arg1[%c0_4] : memref<151xf32, #tpu.memory_space<smem>>
    %5 = vector.broadcast %4 : f32 to vector<8x128xf32>
    %6 = arith.mulf %1, %5 : vector<8x128xf32>
    %c1_5 = arith.constant 1 : index
    %7 = memref.load %arg1[%c1_5] : memref<151xf32, #tpu.memory_space<smem>>
    %8 = vector.broadcast %7 : f32 to vector<8x128xf32>
    %9 = arith.mulf %3, %8 : vector<8x128xf32>
    %10 = arith.addf %6, %9 : vector<8x128xf32>
    %c20 = arith.constant 20 : index
    %11 = memref.load %arg1[%c20] : memref<151xf32, #tpu.memory_space<smem>>
    %12 = vector.broadcast %11 : f32 to vector<8x128xf32>
    %13 = arith.addf %10, %12 : vector<8x128xf32>
    %cst = arith.constant 0.000000e+00 : f32
    %14 = vector.broadcast %cst : f32 to vector<8x128xf32>
    %15 = arith.maximumf %13, %14 : vector<8x128xf32>
    %c2 = arith.constant 2 : index
    %16 = memref.load %arg1[%c2] : memref<151xf32, #tpu.memory_space<smem>>
    %17 = vector.broadcast %16 : f32 to vector<8x128xf32>
    %18 = arith.mulf %1, %17 : vector<8x128xf32>
    %c3 = arith.constant 3 : index
    %19 = memref.load %arg1[%c3] : memref<151xf32, #tpu.memory_space<smem>>
    %20 = vector.broadcast %19 : f32 to vector<8x128xf32>
    %21 = arith.mulf %3, %20 : vector<8x128xf32>
    %22 = arith.addf %18, %21 : vector<8x128xf32>
    %c21 = arith.constant 21 : index
    %23 = memref.load %arg1[%c21] : memref<151xf32, #tpu.memory_space<smem>>
    %24 = vector.broadcast %23 : f32 to vector<8x128xf32>
    %25 = arith.addf %22, %24 : vector<8x128xf32>
    %cst_6 = arith.constant 0.000000e+00 : f32
    %26 = vector.broadcast %cst_6 : f32 to vector<8x128xf32>
    %27 = arith.maximumf %25, %26 : vector<8x128xf32>
    %c4 = arith.constant 4 : index
    %28 = memref.load %arg1[%c4] : memref<151xf32, #tpu.memory_space<smem>>
    %29 = vector.broadcast %28 : f32 to vector<8x128xf32>
    %30 = arith.mulf %1, %29 : vector<8x128xf32>
    %c5 = arith.constant 5 : index
    %31 = memref.load %arg1[%c5] : memref<151xf32, #tpu.memory_space<smem>>
    %32 = vector.broadcast %31 : f32 to vector<8x128xf32>
    %33 = arith.mulf %3, %32 : vector<8x128xf32>
    %34 = arith.addf %30, %33 : vector<8x128xf32>
    %c22 = arith.constant 22 : index
    %35 = memref.load %arg1[%c22] : memref<151xf32, #tpu.memory_space<smem>>
    %36 = vector.broadcast %35 : f32 to vector<8x128xf32>
    %37 = arith.addf %34, %36 : vector<8x128xf32>
    %cst_7 = arith.constant 0.000000e+00 : f32
    %38 = vector.broadcast %cst_7 : f32 to vector<8x128xf32>
    %39 = arith.maximumf %37, %38 : vector<8x128xf32>
    %c6 = arith.constant 6 : index
    %40 = memref.load %arg1[%c6] : memref<151xf32, #tpu.memory_space<smem>>
    %41 = vector.broadcast %40 : f32 to vector<8x128xf32>
    %42 = arith.mulf %1, %41 : vector<8x128xf32>
    %c7 = arith.constant 7 : index
    %43 = memref.load %arg1[%c7] : memref<151xf32, #tpu.memory_space<smem>>
    %44 = vector.broadcast %43 : f32 to vector<8x128xf32>
    %45 = arith.mulf %3, %44 : vector<8x128xf32>
    %46 = arith.addf %42, %45 : vector<8x128xf32>
    %c23 = arith.constant 23 : index
    %47 = memref.load %arg1[%c23] : memref<151xf32, #tpu.memory_space<smem>>
    %48 = vector.broadcast %47 : f32 to vector<8x128xf32>
    %49 = arith.addf %46, %48 : vector<8x128xf32>
    %cst_8 = arith.constant 0.000000e+00 : f32
    %50 = vector.broadcast %cst_8 : f32 to vector<8x128xf32>
    %51 = arith.maximumf %49, %50 : vector<8x128xf32>
    %c8 = arith.constant 8 : index
    %52 = memref.load %arg1[%c8] : memref<151xf32, #tpu.memory_space<smem>>
    %53 = vector.broadcast %52 : f32 to vector<8x128xf32>
    %54 = arith.mulf %1, %53 : vector<8x128xf32>
    %c9 = arith.constant 9 : index
    %55 = memref.load %arg1[%c9] : memref<151xf32, #tpu.memory_space<smem>>
    %56 = vector.broadcast %55 : f32 to vector<8x128xf32>
    %57 = arith.mulf %3, %56 : vector<8x128xf32>
    %58 = arith.addf %54, %57 : vector<8x128xf32>
    %c24 = arith.constant 24 : index
    %59 = memref.load %arg1[%c24] : memref<151xf32, #tpu.memory_space<smem>>
    %60 = vector.broadcast %59 : f32 to vector<8x128xf32>
    %61 = arith.addf %58, %60 : vector<8x128xf32>
    %cst_9 = arith.constant 0.000000e+00 : f32
    %62 = vector.broadcast %cst_9 : f32 to vector<8x128xf32>
    %63 = arith.maximumf %61, %62 : vector<8x128xf32>
    %c10 = arith.constant 10 : index
    %64 = memref.load %arg1[%c10] : memref<151xf32, #tpu.memory_space<smem>>
    %65 = vector.broadcast %64 : f32 to vector<8x128xf32>
    %66 = arith.mulf %1, %65 : vector<8x128xf32>
    %c11 = arith.constant 11 : index
    %67 = memref.load %arg1[%c11] : memref<151xf32, #tpu.memory_space<smem>>
    %68 = vector.broadcast %67 : f32 to vector<8x128xf32>
    %69 = arith.mulf %3, %68 : vector<8x128xf32>
    %70 = arith.addf %66, %69 : vector<8x128xf32>
    %c25 = arith.constant 25 : index
    %71 = memref.load %arg1[%c25] : memref<151xf32, #tpu.memory_space<smem>>
    %72 = vector.broadcast %71 : f32 to vector<8x128xf32>
    %73 = arith.addf %70, %72 : vector<8x128xf32>
    %cst_10 = arith.constant 0.000000e+00 : f32
    %74 = vector.broadcast %cst_10 : f32 to vector<8x128xf32>
    %75 = arith.maximumf %73, %74 : vector<8x128xf32>
    %c12 = arith.constant 12 : index
    %76 = memref.load %arg1[%c12] : memref<151xf32, #tpu.memory_space<smem>>
    %77 = vector.broadcast %76 : f32 to vector<8x128xf32>
    %78 = arith.mulf %1, %77 : vector<8x128xf32>
    %c13 = arith.constant 13 : index
    %79 = memref.load %arg1[%c13] : memref<151xf32, #tpu.memory_space<smem>>
    %80 = vector.broadcast %79 : f32 to vector<8x128xf32>
    %81 = arith.mulf %3, %80 : vector<8x128xf32>
    %82 = arith.addf %78, %81 : vector<8x128xf32>
    %c26 = arith.constant 26 : index
    %83 = memref.load %arg1[%c26] : memref<151xf32, #tpu.memory_space<smem>>
    %84 = vector.broadcast %83 : f32 to vector<8x128xf32>
    %85 = arith.addf %82, %84 : vector<8x128xf32>
    %cst_11 = arith.constant 0.000000e+00 : f32
    %86 = vector.broadcast %cst_11 : f32 to vector<8x128xf32>
    %87 = arith.maximumf %85, %86 : vector<8x128xf32>
    %c14 = arith.constant 14 : index
    %88 = memref.load %arg1[%c14] : memref<151xf32, #tpu.memory_space<smem>>
    %89 = vector.broadcast %88 : f32 to vector<8x128xf32>
    %90 = arith.mulf %1, %89 : vector<8x128xf32>
    %c15 = arith.constant 15 : index
    %91 = memref.load %arg1[%c15] : memref<151xf32, #tpu.memory_space<smem>>
    %92 = vector.broadcast %91 : f32 to vector<8x128xf32>
    %93 = arith.mulf %3, %92 : vector<8x128xf32>
    %94 = arith.addf %90, %93 : vector<8x128xf32>
    %c27 = arith.constant 27 : index
    %95 = memref.load %arg1[%c27] : memref<151xf32, #tpu.memory_space<smem>>
    %96 = vector.broadcast %95 : f32 to vector<8x128xf32>
    %97 = arith.addf %94, %96 : vector<8x128xf32>
    %cst_12 = arith.constant 0.000000e+00 : f32
    %98 = vector.broadcast %cst_12 : f32 to vector<8x128xf32>
    %99 = arith.maximumf %97, %98 : vector<8x128xf32>
    %c16 = arith.constant 16 : index
    %100 = memref.load %arg1[%c16] : memref<151xf32, #tpu.memory_space<smem>>
    %101 = vector.broadcast %100 : f32 to vector<8x128xf32>
    %102 = arith.mulf %1, %101 : vector<8x128xf32>
    %c17 = arith.constant 17 : index
    %103 = memref.load %arg1[%c17] : memref<151xf32, #tpu.memory_space<smem>>
    %104 = vector.broadcast %103 : f32 to vector<8x128xf32>
    %105 = arith.mulf %3, %104 : vector<8x128xf32>
    %106 = arith.addf %102, %105 : vector<8x128xf32>
    %c28 = arith.constant 28 : index
    %107 = memref.load %arg1[%c28] : memref<151xf32, #tpu.memory_space<smem>>
    %108 = vector.broadcast %107 : f32 to vector<8x128xf32>
    %109 = arith.addf %106, %108 : vector<8x128xf32>
    %cst_13 = arith.constant 0.000000e+00 : f32
    %110 = vector.broadcast %cst_13 : f32 to vector<8x128xf32>
    %111 = arith.maximumf %109, %110 : vector<8x128xf32>
    %c18 = arith.constant 18 : index
    %112 = memref.load %arg1[%c18] : memref<151xf32, #tpu.memory_space<smem>>
    %113 = vector.broadcast %112 : f32 to vector<8x128xf32>
    %114 = arith.mulf %1, %113 : vector<8x128xf32>
    %c19 = arith.constant 19 : index
    %115 = memref.load %arg1[%c19] : memref<151xf32, #tpu.memory_space<smem>>
    %116 = vector.broadcast %115 : f32 to vector<8x128xf32>
    %117 = arith.mulf %3, %116 : vector<8x128xf32>
    %118 = arith.addf %114, %117 : vector<8x128xf32>
    %c29 = arith.constant 29 : index
    %119 = memref.load %arg1[%c29] : memref<151xf32, #tpu.memory_space<smem>>
    %120 = vector.broadcast %119 : f32 to vector<8x128xf32>
    %121 = arith.addf %118, %120 : vector<8x128xf32>
    %cst_14 = arith.constant 0.000000e+00 : f32
    %122 = vector.broadcast %cst_14 : f32 to vector<8x128xf32>
    %123 = arith.maximumf %121, %122 : vector<8x128xf32>
    %c30 = arith.constant 30 : index
    %124 = memref.load %arg1[%c30] : memref<151xf32, #tpu.memory_space<smem>>
    %125 = vector.broadcast %124 : f32 to vector<8x128xf32>
    %126 = arith.mulf %15, %125 : vector<8x128xf32>
    %c31 = arith.constant 31 : index
    %127 = memref.load %arg1[%c31] : memref<151xf32, #tpu.memory_space<smem>>
    %128 = vector.broadcast %127 : f32 to vector<8x128xf32>
    %129 = arith.mulf %27, %128 : vector<8x128xf32>
    %130 = arith.addf %126, %129 : vector<8x128xf32>
    %c32 = arith.constant 32 : index
    %131 = memref.load %arg1[%c32] : memref<151xf32, #tpu.memory_space<smem>>
    %132 = vector.broadcast %131 : f32 to vector<8x128xf32>
    %133 = arith.mulf %39, %132 : vector<8x128xf32>
    %134 = arith.addf %130, %133 : vector<8x128xf32>
    %c33 = arith.constant 33 : index
    %135 = memref.load %arg1[%c33] : memref<151xf32, #tpu.memory_space<smem>>
    %136 = vector.broadcast %135 : f32 to vector<8x128xf32>
    %137 = arith.mulf %51, %136 : vector<8x128xf32>
    %138 = arith.addf %134, %137 : vector<8x128xf32>
    %c34 = arith.constant 34 : index
    %139 = memref.load %arg1[%c34] : memref<151xf32, #tpu.memory_space<smem>>
    %140 = vector.broadcast %139 : f32 to vector<8x128xf32>
    %141 = arith.mulf %63, %140 : vector<8x128xf32>
    %142 = arith.addf %138, %141 : vector<8x128xf32>
    %c35 = arith.constant 35 : index
    %143 = memref.load %arg1[%c35] : memref<151xf32, #tpu.memory_space<smem>>
    %144 = vector.broadcast %143 : f32 to vector<8x128xf32>
    %145 = arith.mulf %75, %144 : vector<8x128xf32>
    %146 = arith.addf %142, %145 : vector<8x128xf32>
    %c36 = arith.constant 36 : index
    %147 = memref.load %arg1[%c36] : memref<151xf32, #tpu.memory_space<smem>>
    %148 = vector.broadcast %147 : f32 to vector<8x128xf32>
    %149 = arith.mulf %87, %148 : vector<8x128xf32>
    %150 = arith.addf %146, %149 : vector<8x128xf32>
    %c37 = arith.constant 37 : index
    %151 = memref.load %arg1[%c37] : memref<151xf32, #tpu.memory_space<smem>>
    %152 = vector.broadcast %151 : f32 to vector<8x128xf32>
    %153 = arith.mulf %99, %152 : vector<8x128xf32>
    %154 = arith.addf %150, %153 : vector<8x128xf32>
    %c38 = arith.constant 38 : index
    %155 = memref.load %arg1[%c38] : memref<151xf32, #tpu.memory_space<smem>>
    %156 = vector.broadcast %155 : f32 to vector<8x128xf32>
    %157 = arith.mulf %111, %156 : vector<8x128xf32>
    %158 = arith.addf %154, %157 : vector<8x128xf32>
    %c39 = arith.constant 39 : index
    %159 = memref.load %arg1[%c39] : memref<151xf32, #tpu.memory_space<smem>>
    %160 = vector.broadcast %159 : f32 to vector<8x128xf32>
    %161 = arith.mulf %123, %160 : vector<8x128xf32>
    %162 = arith.addf %158, %161 : vector<8x128xf32>
    %c130 = arith.constant 130 : index
    %163 = memref.load %arg1[%c130] : memref<151xf32, #tpu.memory_space<smem>>
    %164 = vector.broadcast %163 : f32 to vector<8x128xf32>
    %165 = arith.addf %162, %164 : vector<8x128xf32>
    %cst_15 = arith.constant 0.000000e+00 : f32
    %166 = vector.broadcast %cst_15 : f32 to vector<8x128xf32>
    %167 = arith.maximumf %165, %166 : vector<8x128xf32>
    %c40 = arith.constant 40 : index
    %168 = memref.load %arg1[%c40] : memref<151xf32, #tpu.memory_space<smem>>
    %169 = vector.broadcast %168 : f32 to vector<8x128xf32>
    %170 = arith.mulf %15, %169 : vector<8x128xf32>
    %c41 = arith.constant 41 : index
    %171 = memref.load %arg1[%c41] : memref<151xf32, #tpu.memory_space<smem>>
    %172 = vector.broadcast %171 : f32 to vector<8x128xf32>
    %173 = arith.mulf %27, %172 : vector<8x128xf32>
    %174 = arith.addf %170, %173 : vector<8x128xf32>
    %c42 = arith.constant 42 : index
    %175 = memref.load %arg1[%c42] : memref<151xf32, #tpu.memory_space<smem>>
    %176 = vector.broadcast %175 : f32 to vector<8x128xf32>
    %177 = arith.mulf %39, %176 : vector<8x128xf32>
    %178 = arith.addf %174, %177 : vector<8x128xf32>
    %c43 = arith.constant 43 : index
    %179 = memref.load %arg1[%c43] : memref<151xf32, #tpu.memory_space<smem>>
    %180 = vector.broadcast %179 : f32 to vector<8x128xf32>
    %181 = arith.mulf %51, %180 : vector<8x128xf32>
    %182 = arith.addf %178, %181 : vector<8x128xf32>
    %c44 = arith.constant 44 : index
    %183 = memref.load %arg1[%c44] : memref<151xf32, #tpu.memory_space<smem>>
    %184 = vector.broadcast %183 : f32 to vector<8x128xf32>
    %185 = arith.mulf %63, %184 : vector<8x128xf32>
    %186 = arith.addf %182, %185 : vector<8x128xf32>
    %c45 = arith.constant 45 : index
    %187 = memref.load %arg1[%c45] : memref<151xf32, #tpu.memory_space<smem>>
    %188 = vector.broadcast %187 : f32 to vector<8x128xf32>
    %189 = arith.mulf %75, %188 : vector<8x128xf32>
    %190 = arith.addf %186, %189 : vector<8x128xf32>
    %c46 = arith.constant 46 : index
    %191 = memref.load %arg1[%c46] : memref<151xf32, #tpu.memory_space<smem>>
    %192 = vector.broadcast %191 : f32 to vector<8x128xf32>
    %193 = arith.mulf %87, %192 : vector<8x128xf32>
    %194 = arith.addf %190, %193 : vector<8x128xf32>
    %c47 = arith.constant 47 : index
    %195 = memref.load %arg1[%c47] : memref<151xf32, #tpu.memory_space<smem>>
    %196 = vector.broadcast %195 : f32 to vector<8x128xf32>
    %197 = arith.mulf %99, %196 : vector<8x128xf32>
    %198 = arith.addf %194, %197 : vector<8x128xf32>
    %c48 = arith.constant 48 : index
    %199 = memref.load %arg1[%c48] : memref<151xf32, #tpu.memory_space<smem>>
    %200 = vector.broadcast %199 : f32 to vector<8x128xf32>
    %201 = arith.mulf %111, %200 : vector<8x128xf32>
    %202 = arith.addf %198, %201 : vector<8x128xf32>
    %c49 = arith.constant 49 : index
    %203 = memref.load %arg1[%c49] : memref<151xf32, #tpu.memory_space<smem>>
    %204 = vector.broadcast %203 : f32 to vector<8x128xf32>
    %205 = arith.mulf %123, %204 : vector<8x128xf32>
    %206 = arith.addf %202, %205 : vector<8x128xf32>
    %c131 = arith.constant 131 : index
    %207 = memref.load %arg1[%c131] : memref<151xf32, #tpu.memory_space<smem>>
    %208 = vector.broadcast %207 : f32 to vector<8x128xf32>
    %209 = arith.addf %206, %208 : vector<8x128xf32>
    %cst_16 = arith.constant 0.000000e+00 : f32
    %210 = vector.broadcast %cst_16 : f32 to vector<8x128xf32>
    %211 = arith.maximumf %209, %210 : vector<8x128xf32>
    %c50 = arith.constant 50 : index
    %212 = memref.load %arg1[%c50] : memref<151xf32, #tpu.memory_space<smem>>
    %213 = vector.broadcast %212 : f32 to vector<8x128xf32>
    %214 = arith.mulf %15, %213 : vector<8x128xf32>
    %c51 = arith.constant 51 : index
    %215 = memref.load %arg1[%c51] : memref<151xf32, #tpu.memory_space<smem>>
    %216 = vector.broadcast %215 : f32 to vector<8x128xf32>
    %217 = arith.mulf %27, %216 : vector<8x128xf32>
    %218 = arith.addf %214, %217 : vector<8x128xf32>
    %c52 = arith.constant 52 : index
    %219 = memref.load %arg1[%c52] : memref<151xf32, #tpu.memory_space<smem>>
    %220 = vector.broadcast %219 : f32 to vector<8x128xf32>
    %221 = arith.mulf %39, %220 : vector<8x128xf32>
    %222 = arith.addf %218, %221 : vector<8x128xf32>
    %c53 = arith.constant 53 : index
    %223 = memref.load %arg1[%c53] : memref<151xf32, #tpu.memory_space<smem>>
    %224 = vector.broadcast %223 : f32 to vector<8x128xf32>
    %225 = arith.mulf %51, %224 : vector<8x128xf32>
    %226 = arith.addf %222, %225 : vector<8x128xf32>
    %c54 = arith.constant 54 : index
    %227 = memref.load %arg1[%c54] : memref<151xf32, #tpu.memory_space<smem>>
    %228 = vector.broadcast %227 : f32 to vector<8x128xf32>
    %229 = arith.mulf %63, %228 : vector<8x128xf32>
    %230 = arith.addf %226, %229 : vector<8x128xf32>
    %c55 = arith.constant 55 : index
    %231 = memref.load %arg1[%c55] : memref<151xf32, #tpu.memory_space<smem>>
    %232 = vector.broadcast %231 : f32 to vector<8x128xf32>
    %233 = arith.mulf %75, %232 : vector<8x128xf32>
    %234 = arith.addf %230, %233 : vector<8x128xf32>
    %c56 = arith.constant 56 : index
    %235 = memref.load %arg1[%c56] : memref<151xf32, #tpu.memory_space<smem>>
    %236 = vector.broadcast %235 : f32 to vector<8x128xf32>
    %237 = arith.mulf %87, %236 : vector<8x128xf32>
    %238 = arith.addf %234, %237 : vector<8x128xf32>
    %c57 = arith.constant 57 : index
    %239 = memref.load %arg1[%c57] : memref<151xf32, #tpu.memory_space<smem>>
    %240 = vector.broadcast %239 : f32 to vector<8x128xf32>
    %241 = arith.mulf %99, %240 : vector<8x128xf32>
    %242 = arith.addf %238, %241 : vector<8x128xf32>
    %c58 = arith.constant 58 : index
    %243 = memref.load %arg1[%c58] : memref<151xf32, #tpu.memory_space<smem>>
    %244 = vector.broadcast %243 : f32 to vector<8x128xf32>
    %245 = arith.mulf %111, %244 : vector<8x128xf32>
    %246 = arith.addf %242, %245 : vector<8x128xf32>
    %c59 = arith.constant 59 : index
    %247 = memref.load %arg1[%c59] : memref<151xf32, #tpu.memory_space<smem>>
    %248 = vector.broadcast %247 : f32 to vector<8x128xf32>
    %249 = arith.mulf %123, %248 : vector<8x128xf32>
    %250 = arith.addf %246, %249 : vector<8x128xf32>
    %c132 = arith.constant 132 : index
    %251 = memref.load %arg1[%c132] : memref<151xf32, #tpu.memory_space<smem>>
    %252 = vector.broadcast %251 : f32 to vector<8x128xf32>
    %253 = arith.addf %250, %252 : vector<8x128xf32>
    %cst_17 = arith.constant 0.000000e+00 : f32
    %254 = vector.broadcast %cst_17 : f32 to vector<8x128xf32>
    %255 = arith.maximumf %253, %254 : vector<8x128xf32>
    %c60 = arith.constant 60 : index
    %256 = memref.load %arg1[%c60] : memref<151xf32, #tpu.memory_space<smem>>
    %257 = vector.broadcast %256 : f32 to vector<8x128xf32>
    %258 = arith.mulf %15, %257 : vector<8x128xf32>
    %c61 = arith.constant 61 : index
    %259 = memref.load %arg1[%c61] : memref<151xf32, #tpu.memory_space<smem>>
    %260 = vector.broadcast %259 : f32 to vector<8x128xf32>
    %261 = arith.mulf %27, %260 : vector<8x128xf32>
    %262 = arith.addf %258, %261 : vector<8x128xf32>
    %c62 = arith.constant 62 : index
    %263 = memref.load %arg1[%c62] : memref<151xf32, #tpu.memory_space<smem>>
    %264 = vector.broadcast %263 : f32 to vector<8x128xf32>
    %265 = arith.mulf %39, %264 : vector<8x128xf32>
    %266 = arith.addf %262, %265 : vector<8x128xf32>
    %c63 = arith.constant 63 : index
    %267 = memref.load %arg1[%c63] : memref<151xf32, #tpu.memory_space<smem>>
    %268 = vector.broadcast %267 : f32 to vector<8x128xf32>
    %269 = arith.mulf %51, %268 : vector<8x128xf32>
    %270 = arith.addf %266, %269 : vector<8x128xf32>
    %c64 = arith.constant 64 : index
    %271 = memref.load %arg1[%c64] : memref<151xf32, #tpu.memory_space<smem>>
    %272 = vector.broadcast %271 : f32 to vector<8x128xf32>
    %273 = arith.mulf %63, %272 : vector<8x128xf32>
    %274 = arith.addf %270, %273 : vector<8x128xf32>
    %c65 = arith.constant 65 : index
    %275 = memref.load %arg1[%c65] : memref<151xf32, #tpu.memory_space<smem>>
    %276 = vector.broadcast %275 : f32 to vector<8x128xf32>
    %277 = arith.mulf %75, %276 : vector<8x128xf32>
    %278 = arith.addf %274, %277 : vector<8x128xf32>
    %c66 = arith.constant 66 : index
    %279 = memref.load %arg1[%c66] : memref<151xf32, #tpu.memory_space<smem>>
    %280 = vector.broadcast %279 : f32 to vector<8x128xf32>
    %281 = arith.mulf %87, %280 : vector<8x128xf32>
    %282 = arith.addf %278, %281 : vector<8x128xf32>
    %c67 = arith.constant 67 : index
    %283 = memref.load %arg1[%c67] : memref<151xf32, #tpu.memory_space<smem>>
    %284 = vector.broadcast %283 : f32 to vector<8x128xf32>
    %285 = arith.mulf %99, %284 : vector<8x128xf32>
    %286 = arith.addf %282, %285 : vector<8x128xf32>
    %c68 = arith.constant 68 : index
    %287 = memref.load %arg1[%c68] : memref<151xf32, #tpu.memory_space<smem>>
    %288 = vector.broadcast %287 : f32 to vector<8x128xf32>
    %289 = arith.mulf %111, %288 : vector<8x128xf32>
    %290 = arith.addf %286, %289 : vector<8x128xf32>
    %c69 = arith.constant 69 : index
    %291 = memref.load %arg1[%c69] : memref<151xf32, #tpu.memory_space<smem>>
    %292 = vector.broadcast %291 : f32 to vector<8x128xf32>
    %293 = arith.mulf %123, %292 : vector<8x128xf32>
    %294 = arith.addf %290, %293 : vector<8x128xf32>
    %c133 = arith.constant 133 : index
    %295 = memref.load %arg1[%c133] : memref<151xf32, #tpu.memory_space<smem>>
    %296 = vector.broadcast %295 : f32 to vector<8x128xf32>
    %297 = arith.addf %294, %296 : vector<8x128xf32>
    %cst_18 = arith.constant 0.000000e+00 : f32
    %298 = vector.broadcast %cst_18 : f32 to vector<8x128xf32>
    %299 = arith.maximumf %297, %298 : vector<8x128xf32>
    %c70 = arith.constant 70 : index
    %300 = memref.load %arg1[%c70] : memref<151xf32, #tpu.memory_space<smem>>
    %301 = vector.broadcast %300 : f32 to vector<8x128xf32>
    %302 = arith.mulf %15, %301 : vector<8x128xf32>
    %c71 = arith.constant 71 : index
    %303 = memref.load %arg1[%c71] : memref<151xf32, #tpu.memory_space<smem>>
    %304 = vector.broadcast %303 : f32 to vector<8x128xf32>
    %305 = arith.mulf %27, %304 : vector<8x128xf32>
    %306 = arith.addf %302, %305 : vector<8x128xf32>
    %c72 = arith.constant 72 : index
    %307 = memref.load %arg1[%c72] : memref<151xf32, #tpu.memory_space<smem>>
    %308 = vector.broadcast %307 : f32 to vector<8x128xf32>
    %309 = arith.mulf %39, %308 : vector<8x128xf32>
    %310 = arith.addf %306, %309 : vector<8x128xf32>
    %c73 = arith.constant 73 : index
    %311 = memref.load %arg1[%c73] : memref<151xf32, #tpu.memory_space<smem>>
    %312 = vector.broadcast %311 : f32 to vector<8x128xf32>
    %313 = arith.mulf %51, %312 : vector<8x128xf32>
    %314 = arith.addf %310, %313 : vector<8x128xf32>
    %c74 = arith.constant 74 : index
    %315 = memref.load %arg1[%c74] : memref<151xf32, #tpu.memory_space<smem>>
    %316 = vector.broadcast %315 : f32 to vector<8x128xf32>
    %317 = arith.mulf %63, %316 : vector<8x128xf32>
    %318 = arith.addf %314, %317 : vector<8x128xf32>
    %c75 = arith.constant 75 : index
    %319 = memref.load %arg1[%c75] : memref<151xf32, #tpu.memory_space<smem>>
    %320 = vector.broadcast %319 : f32 to vector<8x128xf32>
    %321 = arith.mulf %75, %320 : vector<8x128xf32>
    %322 = arith.addf %318, %321 : vector<8x128xf32>
    %c76 = arith.constant 76 : index
    %323 = memref.load %arg1[%c76] : memref<151xf32, #tpu.memory_space<smem>>
    %324 = vector.broadcast %323 : f32 to vector<8x128xf32>
    %325 = arith.mulf %87, %324 : vector<8x128xf32>
    %326 = arith.addf %322, %325 : vector<8x128xf32>
    %c77 = arith.constant 77 : index
    %327 = memref.load %arg1[%c77] : memref<151xf32, #tpu.memory_space<smem>>
    %328 = vector.broadcast %327 : f32 to vector<8x128xf32>
    %329 = arith.mulf %99, %328 : vector<8x128xf32>
    %330 = arith.addf %326, %329 : vector<8x128xf32>
    %c78 = arith.constant 78 : index
    %331 = memref.load %arg1[%c78] : memref<151xf32, #tpu.memory_space<smem>>
    %332 = vector.broadcast %331 : f32 to vector<8x128xf32>
    %333 = arith.mulf %111, %332 : vector<8x128xf32>
    %334 = arith.addf %330, %333 : vector<8x128xf32>
    %c79 = arith.constant 79 : index
    %335 = memref.load %arg1[%c79] : memref<151xf32, #tpu.memory_space<smem>>
    %336 = vector.broadcast %335 : f32 to vector<8x128xf32>
    %337 = arith.mulf %123, %336 : vector<8x128xf32>
    %338 = arith.addf %334, %337 : vector<8x128xf32>
    %c134 = arith.constant 134 : index
    %339 = memref.load %arg1[%c134] : memref<151xf32, #tpu.memory_space<smem>>
    %340 = vector.broadcast %339 : f32 to vector<8x128xf32>
    %341 = arith.addf %338, %340 : vector<8x128xf32>
    %cst_19 = arith.constant 0.000000e+00 : f32
    %342 = vector.broadcast %cst_19 : f32 to vector<8x128xf32>
    %343 = arith.maximumf %341, %342 : vector<8x128xf32>
    %c80 = arith.constant 80 : index
    %344 = memref.load %arg1[%c80] : memref<151xf32, #tpu.memory_space<smem>>
    %345 = vector.broadcast %344 : f32 to vector<8x128xf32>
    %346 = arith.mulf %15, %345 : vector<8x128xf32>
    %c81 = arith.constant 81 : index
    %347 = memref.load %arg1[%c81] : memref<151xf32, #tpu.memory_space<smem>>
    %348 = vector.broadcast %347 : f32 to vector<8x128xf32>
    %349 = arith.mulf %27, %348 : vector<8x128xf32>
    %350 = arith.addf %346, %349 : vector<8x128xf32>
    %c82 = arith.constant 82 : index
    %351 = memref.load %arg1[%c82] : memref<151xf32, #tpu.memory_space<smem>>
    %352 = vector.broadcast %351 : f32 to vector<8x128xf32>
    %353 = arith.mulf %39, %352 : vector<8x128xf32>
    %354 = arith.addf %350, %353 : vector<8x128xf32>
    %c83 = arith.constant 83 : index
    %355 = memref.load %arg1[%c83] : memref<151xf32, #tpu.memory_space<smem>>
    %356 = vector.broadcast %355 : f32 to vector<8x128xf32>
    %357 = arith.mulf %51, %356 : vector<8x128xf32>
    %358 = arith.addf %354, %357 : vector<8x128xf32>
    %c84 = arith.constant 84 : index
    %359 = memref.load %arg1[%c84] : memref<151xf32, #tpu.memory_space<smem>>
    %360 = vector.broadcast %359 : f32 to vector<8x128xf32>
    %361 = arith.mulf %63, %360 : vector<8x128xf32>
    %362 = arith.addf %358, %361 : vector<8x128xf32>
    %c85 = arith.constant 85 : index
    %363 = memref.load %arg1[%c85] : memref<151xf32, #tpu.memory_space<smem>>
    %364 = vector.broadcast %363 : f32 to vector<8x128xf32>
    %365 = arith.mulf %75, %364 : vector<8x128xf32>
    %366 = arith.addf %362, %365 : vector<8x128xf32>
    %c86 = arith.constant 86 : index
    %367 = memref.load %arg1[%c86] : memref<151xf32, #tpu.memory_space<smem>>
    %368 = vector.broadcast %367 : f32 to vector<8x128xf32>
    %369 = arith.mulf %87, %368 : vector<8x128xf32>
    %370 = arith.addf %366, %369 : vector<8x128xf32>
    %c87 = arith.constant 87 : index
    %371 = memref.load %arg1[%c87] : memref<151xf32, #tpu.memory_space<smem>>
    %372 = vector.broadcast %371 : f32 to vector<8x128xf32>
    %373 = arith.mulf %99, %372 : vector<8x128xf32>
    %374 = arith.addf %370, %373 : vector<8x128xf32>
    %c88 = arith.constant 88 : index
    %375 = memref.load %arg1[%c88] : memref<151xf32, #tpu.memory_space<smem>>
    %376 = vector.broadcast %375 : f32 to vector<8x128xf32>
    %377 = arith.mulf %111, %376 : vector<8x128xf32>
    %378 = arith.addf %374, %377 : vector<8x128xf32>
    %c89 = arith.constant 89 : index
    %379 = memref.load %arg1[%c89] : memref<151xf32, #tpu.memory_space<smem>>
    %380 = vector.broadcast %379 : f32 to vector<8x128xf32>
    %381 = arith.mulf %123, %380 : vector<8x128xf32>
    %382 = arith.addf %378, %381 : vector<8x128xf32>
    %c135 = arith.constant 135 : index
    %383 = memref.load %arg1[%c135] : memref<151xf32, #tpu.memory_space<smem>>
    %384 = vector.broadcast %383 : f32 to vector<8x128xf32>
    %385 = arith.addf %382, %384 : vector<8x128xf32>
    %cst_20 = arith.constant 0.000000e+00 : f32
    %386 = vector.broadcast %cst_20 : f32 to vector<8x128xf32>
    %387 = arith.maximumf %385, %386 : vector<8x128xf32>
    %c90 = arith.constant 90 : index
    %388 = memref.load %arg1[%c90] : memref<151xf32, #tpu.memory_space<smem>>
    %389 = vector.broadcast %388 : f32 to vector<8x128xf32>
    %390 = arith.mulf %15, %389 : vector<8x128xf32>
    %c91 = arith.constant 91 : index
    %391 = memref.load %arg1[%c91] : memref<151xf32, #tpu.memory_space<smem>>
    %392 = vector.broadcast %391 : f32 to vector<8x128xf32>
    %393 = arith.mulf %27, %392 : vector<8x128xf32>
    %394 = arith.addf %390, %393 : vector<8x128xf32>
    %c92 = arith.constant 92 : index
    %395 = memref.load %arg1[%c92] : memref<151xf32, #tpu.memory_space<smem>>
    %396 = vector.broadcast %395 : f32 to vector<8x128xf32>
    %397 = arith.mulf %39, %396 : vector<8x128xf32>
    %398 = arith.addf %394, %397 : vector<8x128xf32>
    %c93 = arith.constant 93 : index
    %399 = memref.load %arg1[%c93] : memref<151xf32, #tpu.memory_space<smem>>
    %400 = vector.broadcast %399 : f32 to vector<8x128xf32>
    %401 = arith.mulf %51, %400 : vector<8x128xf32>
    %402 = arith.addf %398, %401 : vector<8x128xf32>
    %c94 = arith.constant 94 : index
    %403 = memref.load %arg1[%c94] : memref<151xf32, #tpu.memory_space<smem>>
    %404 = vector.broadcast %403 : f32 to vector<8x128xf32>
    %405 = arith.mulf %63, %404 : vector<8x128xf32>
    %406 = arith.addf %402, %405 : vector<8x128xf32>
    %c95 = arith.constant 95 : index
    %407 = memref.load %arg1[%c95] : memref<151xf32, #tpu.memory_space<smem>>
    %408 = vector.broadcast %407 : f32 to vector<8x128xf32>
    %409 = arith.mulf %75, %408 : vector<8x128xf32>
    %410 = arith.addf %406, %409 : vector<8x128xf32>
    %c96 = arith.constant 96 : index
    %411 = memref.load %arg1[%c96] : memref<151xf32, #tpu.memory_space<smem>>
    %412 = vector.broadcast %411 : f32 to vector<8x128xf32>
    %413 = arith.mulf %87, %412 : vector<8x128xf32>
    %414 = arith.addf %410, %413 : vector<8x128xf32>
    %c97 = arith.constant 97 : index
    %415 = memref.load %arg1[%c97] : memref<151xf32, #tpu.memory_space<smem>>
    %416 = vector.broadcast %415 : f32 to vector<8x128xf32>
    %417 = arith.mulf %99, %416 : vector<8x128xf32>
    %418 = arith.addf %414, %417 : vector<8x128xf32>
    %c98 = arith.constant 98 : index
    %419 = memref.load %arg1[%c98] : memref<151xf32, #tpu.memory_space<smem>>
    %420 = vector.broadcast %419 : f32 to vector<8x128xf32>
    %421 = arith.mulf %111, %420 : vector<8x128xf32>
    %422 = arith.addf %418, %421 : vector<8x128xf32>
    %c99 = arith.constant 99 : index
    %423 = memref.load %arg1[%c99] : memref<151xf32, #tpu.memory_space<smem>>
    %424 = vector.broadcast %423 : f32 to vector<8x128xf32>
    %425 = arith.mulf %123, %424 : vector<8x128xf32>
    %426 = arith.addf %422, %425 : vector<8x128xf32>
    %c136 = arith.constant 136 : index
    %427 = memref.load %arg1[%c136] : memref<151xf32, #tpu.memory_space<smem>>
    %428 = vector.broadcast %427 : f32 to vector<8x128xf32>
    %429 = arith.addf %426, %428 : vector<8x128xf32>
    %cst_21 = arith.constant 0.000000e+00 : f32
    %430 = vector.broadcast %cst_21 : f32 to vector<8x128xf32>
    %431 = arith.maximumf %429, %430 : vector<8x128xf32>
    %c100 = arith.constant 100 : index
    %432 = memref.load %arg1[%c100] : memref<151xf32, #tpu.memory_space<smem>>
    %433 = vector.broadcast %432 : f32 to vector<8x128xf32>
    %434 = arith.mulf %15, %433 : vector<8x128xf32>
    %c101 = arith.constant 101 : index
    %435 = memref.load %arg1[%c101] : memref<151xf32, #tpu.memory_space<smem>>
    %436 = vector.broadcast %435 : f32 to vector<8x128xf32>
    %437 = arith.mulf %27, %436 : vector<8x128xf32>
    %438 = arith.addf %434, %437 : vector<8x128xf32>
    %c102 = arith.constant 102 : index
    %439 = memref.load %arg1[%c102] : memref<151xf32, #tpu.memory_space<smem>>
    %440 = vector.broadcast %439 : f32 to vector<8x128xf32>
    %441 = arith.mulf %39, %440 : vector<8x128xf32>
    %442 = arith.addf %438, %441 : vector<8x128xf32>
    %c103 = arith.constant 103 : index
    %443 = memref.load %arg1[%c103] : memref<151xf32, #tpu.memory_space<smem>>
    %444 = vector.broadcast %443 : f32 to vector<8x128xf32>
    %445 = arith.mulf %51, %444 : vector<8x128xf32>
    %446 = arith.addf %442, %445 : vector<8x128xf32>
    %c104 = arith.constant 104 : index
    %447 = memref.load %arg1[%c104] : memref<151xf32, #tpu.memory_space<smem>>
    %448 = vector.broadcast %447 : f32 to vector<8x128xf32>
    %449 = arith.mulf %63, %448 : vector<8x128xf32>
    %450 = arith.addf %446, %449 : vector<8x128xf32>
    %c105 = arith.constant 105 : index
    %451 = memref.load %arg1[%c105] : memref<151xf32, #tpu.memory_space<smem>>
    %452 = vector.broadcast %451 : f32 to vector<8x128xf32>
    %453 = arith.mulf %75, %452 : vector<8x128xf32>
    %454 = arith.addf %450, %453 : vector<8x128xf32>
    %c106 = arith.constant 106 : index
    %455 = memref.load %arg1[%c106] : memref<151xf32, #tpu.memory_space<smem>>
    %456 = vector.broadcast %455 : f32 to vector<8x128xf32>
    %457 = arith.mulf %87, %456 : vector<8x128xf32>
    %458 = arith.addf %454, %457 : vector<8x128xf32>
    %c107 = arith.constant 107 : index
    %459 = memref.load %arg1[%c107] : memref<151xf32, #tpu.memory_space<smem>>
    %460 = vector.broadcast %459 : f32 to vector<8x128xf32>
    %461 = arith.mulf %99, %460 : vector<8x128xf32>
    %462 = arith.addf %458, %461 : vector<8x128xf32>
    %c108 = arith.constant 108 : index
    %463 = memref.load %arg1[%c108] : memref<151xf32, #tpu.memory_space<smem>>
    %464 = vector.broadcast %463 : f32 to vector<8x128xf32>
    %465 = arith.mulf %111, %464 : vector<8x128xf32>
    %466 = arith.addf %462, %465 : vector<8x128xf32>
    %c109 = arith.constant 109 : index
    %467 = memref.load %arg1[%c109] : memref<151xf32, #tpu.memory_space<smem>>
    %468 = vector.broadcast %467 : f32 to vector<8x128xf32>
    %469 = arith.mulf %123, %468 : vector<8x128xf32>
    %470 = arith.addf %466, %469 : vector<8x128xf32>
    %c137 = arith.constant 137 : index
    %471 = memref.load %arg1[%c137] : memref<151xf32, #tpu.memory_space<smem>>
    %472 = vector.broadcast %471 : f32 to vector<8x128xf32>
    %473 = arith.addf %470, %472 : vector<8x128xf32>
    %cst_22 = arith.constant 0.000000e+00 : f32
    %474 = vector.broadcast %cst_22 : f32 to vector<8x128xf32>
    %475 = arith.maximumf %473, %474 : vector<8x128xf32>
    %c110 = arith.constant 110 : index
    %476 = memref.load %arg1[%c110] : memref<151xf32, #tpu.memory_space<smem>>
    %477 = vector.broadcast %476 : f32 to vector<8x128xf32>
    %478 = arith.mulf %15, %477 : vector<8x128xf32>
    %c111 = arith.constant 111 : index
    %479 = memref.load %arg1[%c111] : memref<151xf32, #tpu.memory_space<smem>>
    %480 = vector.broadcast %479 : f32 to vector<8x128xf32>
    %481 = arith.mulf %27, %480 : vector<8x128xf32>
    %482 = arith.addf %478, %481 : vector<8x128xf32>
    %c112 = arith.constant 112 : index
    %483 = memref.load %arg1[%c112] : memref<151xf32, #tpu.memory_space<smem>>
    %484 = vector.broadcast %483 : f32 to vector<8x128xf32>
    %485 = arith.mulf %39, %484 : vector<8x128xf32>
    %486 = arith.addf %482, %485 : vector<8x128xf32>
    %c113 = arith.constant 113 : index
    %487 = memref.load %arg1[%c113] : memref<151xf32, #tpu.memory_space<smem>>
    %488 = vector.broadcast %487 : f32 to vector<8x128xf32>
    %489 = arith.mulf %51, %488 : vector<8x128xf32>
    %490 = arith.addf %486, %489 : vector<8x128xf32>
    %c114 = arith.constant 114 : index
    %491 = memref.load %arg1[%c114] : memref<151xf32, #tpu.memory_space<smem>>
    %492 = vector.broadcast %491 : f32 to vector<8x128xf32>
    %493 = arith.mulf %63, %492 : vector<8x128xf32>
    %494 = arith.addf %490, %493 : vector<8x128xf32>
    %c115 = arith.constant 115 : index
    %495 = memref.load %arg1[%c115] : memref<151xf32, #tpu.memory_space<smem>>
    %496 = vector.broadcast %495 : f32 to vector<8x128xf32>
    %497 = arith.mulf %75, %496 : vector<8x128xf32>
    %498 = arith.addf %494, %497 : vector<8x128xf32>
    %c116 = arith.constant 116 : index
    %499 = memref.load %arg1[%c116] : memref<151xf32, #tpu.memory_space<smem>>
    %500 = vector.broadcast %499 : f32 to vector<8x128xf32>
    %501 = arith.mulf %87, %500 : vector<8x128xf32>
    %502 = arith.addf %498, %501 : vector<8x128xf32>
    %c117 = arith.constant 117 : index
    %503 = memref.load %arg1[%c117] : memref<151xf32, #tpu.memory_space<smem>>
    %504 = vector.broadcast %503 : f32 to vector<8x128xf32>
    %505 = arith.mulf %99, %504 : vector<8x128xf32>
    %506 = arith.addf %502, %505 : vector<8x128xf32>
    %c118 = arith.constant 118 : index
    %507 = memref.load %arg1[%c118] : memref<151xf32, #tpu.memory_space<smem>>
    %508 = vector.broadcast %507 : f32 to vector<8x128xf32>
    %509 = arith.mulf %111, %508 : vector<8x128xf32>
    %510 = arith.addf %506, %509 : vector<8x128xf32>
    %c119 = arith.constant 119 : index
    %511 = memref.load %arg1[%c119] : memref<151xf32, #tpu.memory_space<smem>>
    %512 = vector.broadcast %511 : f32 to vector<8x128xf32>
    %513 = arith.mulf %123, %512 : vector<8x128xf32>
    %514 = arith.addf %510, %513 : vector<8x128xf32>
    %c138 = arith.constant 138 : index
    %515 = memref.load %arg1[%c138] : memref<151xf32, #tpu.memory_space<smem>>
    %516 = vector.broadcast %515 : f32 to vector<8x128xf32>
    %517 = arith.addf %514, %516 : vector<8x128xf32>
    %cst_23 = arith.constant 0.000000e+00 : f32
    %518 = vector.broadcast %cst_23 : f32 to vector<8x128xf32>
    %519 = arith.maximumf %517, %518 : vector<8x128xf32>
    %c120 = arith.constant 120 : index
    %520 = memref.load %arg1[%c120] : memref<151xf32, #tpu.memory_space<smem>>
    %521 = vector.broadcast %520 : f32 to vector<8x128xf32>
    %522 = arith.mulf %15, %521 : vector<8x128xf32>
    %c121 = arith.constant 121 : index
    %523 = memref.load %arg1[%c121] : memref<151xf32, #tpu.memory_space<smem>>
    %524 = vector.broadcast %523 : f32 to vector<8x128xf32>
    %525 = arith.mulf %27, %524 : vector<8x128xf32>
    %526 = arith.addf %522, %525 : vector<8x128xf32>
    %c122 = arith.constant 122 : index
    %527 = memref.load %arg1[%c122] : memref<151xf32, #tpu.memory_space<smem>>
    %528 = vector.broadcast %527 : f32 to vector<8x128xf32>
    %529 = arith.mulf %39, %528 : vector<8x128xf32>
    %530 = arith.addf %526, %529 : vector<8x128xf32>
    %c123 = arith.constant 123 : index
    %531 = memref.load %arg1[%c123] : memref<151xf32, #tpu.memory_space<smem>>
    %532 = vector.broadcast %531 : f32 to vector<8x128xf32>
    %533 = arith.mulf %51, %532 : vector<8x128xf32>
    %534 = arith.addf %530, %533 : vector<8x128xf32>
    %c124 = arith.constant 124 : index
    %535 = memref.load %arg1[%c124] : memref<151xf32, #tpu.memory_space<smem>>
    %536 = vector.broadcast %535 : f32 to vector<8x128xf32>
    %537 = arith.mulf %63, %536 : vector<8x128xf32>
    %538 = arith.addf %534, %537 : vector<8x128xf32>
    %c125 = arith.constant 125 : index
    %539 = memref.load %arg1[%c125] : memref<151xf32, #tpu.memory_space<smem>>
    %540 = vector.broadcast %539 : f32 to vector<8x128xf32>
    %541 = arith.mulf %75, %540 : vector<8x128xf32>
    %542 = arith.addf %538, %541 : vector<8x128xf32>
    %c126 = arith.constant 126 : index
    %543 = memref.load %arg1[%c126] : memref<151xf32, #tpu.memory_space<smem>>
    %544 = vector.broadcast %543 : f32 to vector<8x128xf32>
    %545 = arith.mulf %87, %544 : vector<8x128xf32>
    %546 = arith.addf %542, %545 : vector<8x128xf32>
    %c127 = arith.constant 127 : index
    %547 = memref.load %arg1[%c127] : memref<151xf32, #tpu.memory_space<smem>>
    %548 = vector.broadcast %547 : f32 to vector<8x128xf32>
    %549 = arith.mulf %99, %548 : vector<8x128xf32>
    %550 = arith.addf %546, %549 : vector<8x128xf32>
    %c128 = arith.constant 128 : index
    %551 = memref.load %arg1[%c128] : memref<151xf32, #tpu.memory_space<smem>>
    %552 = vector.broadcast %551 : f32 to vector<8x128xf32>
    %553 = arith.mulf %111, %552 : vector<8x128xf32>
    %554 = arith.addf %550, %553 : vector<8x128xf32>
    %c129 = arith.constant 129 : index
    %555 = memref.load %arg1[%c129] : memref<151xf32, #tpu.memory_space<smem>>
    %556 = vector.broadcast %555 : f32 to vector<8x128xf32>
    %557 = arith.mulf %123, %556 : vector<8x128xf32>
    %558 = arith.addf %554, %557 : vector<8x128xf32>
    %c139 = arith.constant 139 : index
    %559 = memref.load %arg1[%c139] : memref<151xf32, #tpu.memory_space<smem>>
    %560 = vector.broadcast %559 : f32 to vector<8x128xf32>
    %561 = arith.addf %558, %560 : vector<8x128xf32>
    %cst_24 = arith.constant 0.000000e+00 : f32
    %562 = vector.broadcast %cst_24 : f32 to vector<8x128xf32>
    %563 = arith.maximumf %561, %562 : vector<8x128xf32>
    %c140 = arith.constant 140 : index
    %564 = memref.load %arg1[%c140] : memref<151xf32, #tpu.memory_space<smem>>
    %565 = vector.broadcast %564 : f32 to vector<8x128xf32>
    %566 = arith.mulf %167, %565 : vector<8x128xf32>
    %c141 = arith.constant 141 : index
    %567 = memref.load %arg1[%c141] : memref<151xf32, #tpu.memory_space<smem>>
    %568 = vector.broadcast %567 : f32 to vector<8x128xf32>
    %569 = arith.mulf %211, %568 : vector<8x128xf32>
    %570 = arith.addf %566, %569 : vector<8x128xf32>
    %c142 = arith.constant 142 : index
    %571 = memref.load %arg1[%c142] : memref<151xf32, #tpu.memory_space<smem>>
    %572 = vector.broadcast %571 : f32 to vector<8x128xf32>
    %573 = arith.mulf %255, %572 : vector<8x128xf32>
    %574 = arith.addf %570, %573 : vector<8x128xf32>
    %c143 = arith.constant 143 : index
    %575 = memref.load %arg1[%c143] : memref<151xf32, #tpu.memory_space<smem>>
    %576 = vector.broadcast %575 : f32 to vector<8x128xf32>
    %577 = arith.mulf %299, %576 : vector<8x128xf32>
    %578 = arith.addf %574, %577 : vector<8x128xf32>
    %c144 = arith.constant 144 : index
    %579 = memref.load %arg1[%c144] : memref<151xf32, #tpu.memory_space<smem>>
    %580 = vector.broadcast %579 : f32 to vector<8x128xf32>
    %581 = arith.mulf %343, %580 : vector<8x128xf32>
    %582 = arith.addf %578, %581 : vector<8x128xf32>
    %c145 = arith.constant 145 : index
    %583 = memref.load %arg1[%c145] : memref<151xf32, #tpu.memory_space<smem>>
    %584 = vector.broadcast %583 : f32 to vector<8x128xf32>
    %585 = arith.mulf %387, %584 : vector<8x128xf32>
    %586 = arith.addf %582, %585 : vector<8x128xf32>
    %c146 = arith.constant 146 : index
    %587 = memref.load %arg1[%c146] : memref<151xf32, #tpu.memory_space<smem>>
    %588 = vector.broadcast %587 : f32 to vector<8x128xf32>
    %589 = arith.mulf %431, %588 : vector<8x128xf32>
    %590 = arith.addf %586, %589 : vector<8x128xf32>
    %c147 = arith.constant 147 : index
    %591 = memref.load %arg1[%c147] : memref<151xf32, #tpu.memory_space<smem>>
    %592 = vector.broadcast %591 : f32 to vector<8x128xf32>
    %593 = arith.mulf %475, %592 : vector<8x128xf32>
    %594 = arith.addf %590, %593 : vector<8x128xf32>
    %c148 = arith.constant 148 : index
    %595 = memref.load %arg1[%c148] : memref<151xf32, #tpu.memory_space<smem>>
    %596 = vector.broadcast %595 : f32 to vector<8x128xf32>
    %597 = arith.mulf %519, %596 : vector<8x128xf32>
    %598 = arith.addf %594, %597 : vector<8x128xf32>
    %c149 = arith.constant 149 : index
    %599 = memref.load %arg1[%c149] : memref<151xf32, #tpu.memory_space<smem>>
    %600 = vector.broadcast %599 : f32 to vector<8x128xf32>
    %601 = arith.mulf %563, %600 : vector<8x128xf32>
    %602 = arith.addf %598, %601 : vector<8x128xf32>
    %c150 = arith.constant 150 : index
    %603 = memref.load %arg1[%c150] : memref<151xf32, #tpu.memory_space<smem>>
    %604 = vector.broadcast %603 : f32 to vector<8x128xf32>
    %605 = arith.addf %602, %604 : vector<8x128xf32>
    %c0_25 = arith.constant 0 : index
    %c0_26 = arith.constant 0 : index
    %606 = vector.load %arg3[%c0_25, %c0_26] : memref<8x128xf32, #tpu.memory_space<vmem>>, vector<8x128xf32>
    tpu.vector_store %arg3[%c0_25, %c0_26], %605 {strides = array<i32>} : memref<8x128xf32, #tpu.memory_space<vmem>>, vector<8x128xf32>,
    return
  }
  func.func @transform_0(%arg0: i32) -> i32 {
    %c0_i32 = arith.constant 0 : i32
    %c0_i32_0 = arith.constant 0 : i32
    return %c0_i32 : i32
  }
  func.func @transform_1(%arg0: i32) -> (i32, i32, i32) {
    %c0_i32 = arith.constant 0 : i32
    %c0_i32_0 = arith.constant 0 : i32
    %c0_i32_1 = arith.constant 0 : i32
    return %c0_i32, %arg0, %c0_i32_0 : i32, i32, i32
  }
  func.func @transform_2(%arg0: i32) -> (i32, i32) {
    %c0_i32 = arith.constant 0 : i32
    %c0_i32_0 = arith.constant 0 : i32
    return %arg0, %c0_i32 : i32, i32
  }
}

</mosaic_0001>

<llo_original>
// kernel: tpu_custom_call.1
$region0: #{tpu_custom_call.1}
  #allocation0 [shape = 'u32[]', space=smem, size = 0x4, offset = 0x4, fixed_abs, tag = 'smem constant byte address 0x4 - core index']
  #allocation1 [shape = 'u32[144,128]{1,0:T(1,128)}', space=vmem, size = 0x12000, scoped, tag = 'internal scratch']
  %s0 = inlined_call_operand.hbm [shape: f32[151], index: 0, kind: input, shape index: {}]
  %s1 = inlined_call_operand.hbm [shape: f32[2,8,128], index: 1, kind: input, shape index: {}]
  %s2 = inlined_call_operand.hbm [shape: f32[8,128], index: 2, kind: output, shape index: {}]
  %s3 = sld [smem:[#allocation0]]
  $region26: #{tpu_custom_call.1} parent=0
    _
  %s5 = ssub.s32 1, %s3
  %s6 = scalar_select 0, %s5, %s3
  $region1: #{tpu_custom_call.1} parent=0
    #allocation2 [shape = 'u8[1024]{0}', space=smem, size = 0x400, scoped, tag = 'input window, operand 0, single buffered']
    #allocation3 [shape = 's32[1]{0}', space=sflag, size = 0x4, scoped, tag = 'scoped memory for tpu_custom_call.1']
    #allocation4 [shape = 's32[1]{0}', space=sflag, size = 0x4, scoped, tag = 'scoped memory for tpu_custom_call.1']
    #allocation5 [shape = 's32[1]{0}', space=sflag, size = 0x4, scoped, tag = 'scoped memory for tpu_custom_call.1']
    #allocation6 [shape = 'u8[8192]{0}', space=vmem, size = 0x2000, scoped, tag = 'input window, operand 1, single buffered']
    #allocation7 [shape = 'u8[4096]{0}', space=vmem, size = 0x1000, scoped, tag = 'output window, operand 0, single buffered']
    %7 = vsyncpa [#allocation5], 0
    %8 = vsyncpa [#allocation3], 0
    %9 = vsyncpa [#allocation4], 0
    // Predicated region
    $region2: #{tpu_custom_call.1} parent=1 // pred_check
      _
    $region3: #{tpu_custom_call.1} parent=1 // pred_check_branch
      %11 = sbr.rel (0) target = $region5
    $region4: #{tpu_custom_call.1} parent=1 // pred_region
      %s13 = ssub.s32 32, 32
      %14 = vsyncadd [#allocation5], %s13
      %17 = dma.hbm_to_smem %s0, 32, [#allocation2], [#allocation5]
    $region5: #{tpu_custom_call.1} parent=1 // pred_fallthru
      _
    // Predicated region
    $region6: #{tpu_custom_call.1} parent=1 // pred_check
      _
    $region7: #{tpu_custom_call.1} parent=1 // pred_check_branch
      %19 = sbr.rel (0) target = $region9
    $region8: #{tpu_custom_call.1} parent=1 // pred_region
      %s21 = ssub.s32 256, 256
      %22 = vsyncadd [#allocation3], %s21
      %s23 = sshll.u32 [#allocation6], 4
      %s24 = int_to_ptr.vmem [resolvable:$true] %s23
      %29 = dma.hbm_to_vmem [thread:$0]  %s1, 256, %s24, [#allocation3], 128, 128, 8
    $region9: #{tpu_custom_call.1} parent=1 // pred_fallthru
      _
    // Predicated region
    $region10: #{tpu_custom_call.1} parent=1 // pred_check
      _
    $region11: #{tpu_custom_call.1} parent=1 // pred_check_branch
      %31 = sbr.rel (0) target = $region13
    $region12: #{tpu_custom_call.1} parent=1 // pred_region
      %32 = dma.done [#allocation5], 32
    $region13: #{tpu_custom_call.1} parent=1 // pred_fallthru
      _
    // Predicated region
    $region14: #{tpu_custom_call.1} parent=1 // pred_check
      _
    $region15: #{tpu_custom_call.1} parent=1 // pred_check_branch
      %34 = sbr.rel (0) target = $region17
    $region16: #{tpu_custom_call.1} parent=1 // pred_region
      %35 = dma.done [#allocation3], 256
    $region17: #{tpu_custom_call.1} parent=1 // pred_fallthru
      _
    %36 = sfence
    %v37 = vld [vmem:[#allocation6] sm:$0xff]
    %s38 = scalar_lea.vmem [#allocation6], 8
    %v39 = vld [vmem:[%s38] sm:$0xff]
    %s40 = sld [smem:[#allocation2]]
    %v41 = vstv %s40
    %v42 = vmul.f32 %v37, %v41
    %s43 = sld [smem:[#allocation2 + $0x1]]
    %v44 = vstv %s43
    %v45 = vmul.f32 %v39, %v44
    %v46 = vadd.f32 %v42, %v45
    %s47 = sld [smem:[#allocation2 + $0x14]]
    %v48 = vstv %s47
    %v49 = vadd.f32 %v46, %v48
    %v50 = vmax.f32 %v49, 0.0
    %s51 = sld [smem:[#allocation2 + $0x2]]
    %v52 = vstv %s51
    %v53 = vmul.f32 %v37, %v52
    %s54 = sld [smem:[#allocation2 + $0x3]]
    %v55 = vstv %s54
    %v56 = vmul.f32 %v39, %v55
    %v57 = vadd.f32 %v53, %v56
    %s58 = sld [smem:[#allocation2 + $0x15]]
    %v59 = vstv %s58
    %v60 = vadd.f32 %v57, %v59
    %v61 = vmax.f32 %v60, 0.0
    %s62 = sld [smem:[#allocation2 + $0x4]]
    %v63 = vstv %s62
    %v64 = vmul.f32 %v37, %v63
    %s65 = sld [smem:[#allocation2 + $0x5]]
    %v66 = vstv %s65
    %v67 = vmul.f32 %v39, %v66
    %v68 = vadd.f32 %v64, %v67
    %s69 = sld [smem:[#allocation2 + $0x16]]
    %v70 = vstv %s69
    %v71 = vadd.f32 %v68, %v70
    %v72 = vmax.f32 %v71, 0.0
    %s73 = sld [smem:[#allocation2 + $0x6]]
    %v74 = vstv %s73
    %v75 = vmul.f32 %v37, %v74
    %s76 = sld [smem:[#allocation2 + $0x7]]
    %v77 = vstv %s76
    %v78 = vmul.f32 %v39, %v77
    %v79 = vadd.f32 %v75, %v78
    %s80 = sld [smem:[#allocation2 + $0x17]]
    %v81 = vstv %s80
    %v82 = vadd.f32 %v79, %v81
    %v83 = vmax.f32 %v82, 0.0
    %s84 = sld [smem:[#allocation2 + $0x8]]
    %v85 = vstv %s84
    %v86 = vmul.f32 %v37, %v85
    %s87 = sld [smem:[#allocation2 + $0x9]]
    %v88 = vstv %s87
    %v89 = vmul.f32 %v39, %v88
    %v90 = vadd.f32 %v86, %v89
    %s91 = sld [smem:[#allocation2 + $0x18]]
    %v92 = vstv %s91
    %v93 = vadd.f32 %v90, %v92
    %v94 = vmax.f32 %v93, 0.0
    %s95 = sld [smem:[#allocation2 + $0xa]]
    %v96 = vstv %s95
    %v97 = vmul.f32 %v37, %v96
    %s98 = sld [smem:[#allocation2 + $0xb]]
    %v99 = vstv %s98
    %v100 = vmul.f32 %v39, %v99
    %v101 = vadd.f32 %v97, %v100
    %s102 = sld [smem:[#allocation2 + $0x19]]
    %v103 = vstv %s102
    %v104 = vadd.f32 %v101, %v103
    %v105 = vmax.f32 %v104, 0.0
    %s106 = sld [smem:[#allocation2 + $0xc]]
    %v107 = vstv %s106
    %v108 = vmul.f32 %v37, %v107
    %s109 = sld [smem:[#allocation2 + $0xd]]
    %v110 = vstv %s109
    %v111 = vmul.f32 %v39, %v110
    %v112 = vadd.f32 %v108, %v111
    %s113 = sld [smem:[#allocation2 + $0x1a]]
    %v114 = vstv %s113
    %v115 = vadd.f32 %v112, %v114
    %v116 = vmax.f32 %v115, 0.0
    %s117 = sld [smem:[#allocation2 + $0xe]]
    %v118 = vstv %s117
    %v119 = vmul.f32 %v37, %v118
    %s120 = sld [smem:[#allocation2 + $0xf]]
    %v121 = vstv %s120
    %v122 = vmul.f32 %v39, %v121
    %v123 = vadd.f32 %v119, %v122
    %s124 = sld [smem:[#allocation2 + $0x1b]]
    %v125 = vstv %s124
    %v126 = vadd.f32 %v123, %v125
    %v127 = vmax.f32 %v126, 0.0
    %s128 = sld [smem:[#allocation2 + $0x10]]
    %v129 = vstv %s128
    %v130 = vmul.f32 %v37, %v129
    %s131 = sld [smem:[#allocation2 + $0x11]]
    %v132 = vstv %s131
    %v133 = vmul.f32 %v39, %v132
    %v134 = vadd.f32 %v130, %v133
    %s135 = sld [smem:[#allocation2 + $0x1c]]
    %v136 = vstv %s135
    %v137 = vadd.f32 %v134, %v136
    %v138 = vmax.f32 %v137, 0.0
    %s139 = sld [smem:[#allocation2 + $0x12]]
    %v140 = vstv %s139
    %v141 = vmul.f32 %v37, %v140
    %s142 = sld [smem:[#allocation2 + $0x13]]
    %v143 = vstv %s142
    %v144 = vmul.f32 %v39, %v143
    %v145 = vadd.f32 %v141, %v144
    %s146 = sld [smem:[#allocation2 + $0x1d]]
    %v147 = vstv %s146
    %v148 = vadd.f32 %v145, %v147
    %v149 = vmax.f32 %v148, 0.0
    %s150 = sld [smem:[#allocation2 + $0x1e]]
    %v151 = vstv %s150
    %v152 = vmul.f32 %v50, %v151
    %s153 = sld [smem:[#allocation2 + $0x1f]]
    %v154 = vstv %s153
    %v155 = vmul.f32 %v61, %v154
    %v156 = vadd.f32 %v152, %v155
    %s157 = sld [smem:[#allocation2 + $0x20]]
    %v158 = vstv %s157
    %v159 = vmul.f32 %v72, %v158
    %v160 = vadd.f32 %v156, %v159
    %s161 = sld [smem:[#allocation2 + $0x21]]
    %v162 = vstv %s161
    %v163 = vmul.f32 %v83, %v162
    %v164 = vadd.f32 %v160, %v163
    %s165 = sld [smem:[#allocation2 + $0x22]]
    %v166 = vstv %s165
    %v167 = vmul.f32 %v94, %v166
    %v168 = vadd.f32 %v164, %v167
    %s169 = sld [smem:[#allocation2 + $0x23]]
    %v170 = vstv %s169
    %v171 = vmul.f32 %v105, %v170
    %v172 = vadd.f32 %v168, %v171
    %s173 = sld [smem:[#allocation2 + $0x24]]
    %v174 = vstv %s173
    %v175 = vmul.f32 %v116, %v174
    %v176 = vadd.f32 %v172, %v175
    %s177 = sld [smem:[#allocation2 + $0x25]]
    %v178 = vstv %s177
    %v179 = vmul.f32 %v127, %v178
    %v180 = vadd.f32 %v176, %v179
    %s181 = sld [smem:[#allocation2 + $0x26]]
    %v182 = vstv %s181
    %v183 = vmul.f32 %v138, %v182
    %v184 = vadd.f32 %v180, %v183
    %s185 = sld [smem:[#allocation2 + $0x27]]
    %v186 = vstv %s185
    %v187 = vmul.f32 %v149, %v186
    %v188 = vadd.f32 %v184, %v187
    %s189 = sld [smem:[#allocation2 + $0x82]]
    %v190 = vstv %s189
    %v191 = vadd.f32 %v188, %v190
    %v192 = vmax.f32 %v191, 0.0
    %s193 = sld [smem:[#allocation2 + $0x28]]
    %v194 = vstv %s193
    %v195 = vmul.f32 %v50, %v194
    %s196 = sld [smem:[#allocation2 + $0x29]]
    %v197 = vstv %s196
    %v198 = vmul.f32 %v61, %v197
    %v199 = vadd.f32 %v195, %v198
    %s200 = sld [smem:[#allocation2 + $0x2a]]
    %v201 = vstv %s200
    %v202 = vmul.f32 %v72, %v201
    %v203 = vadd.f32 %v199, %v202
    %s204 = sld [smem:[#allocation2 + $0x2b]]
    %v205 = vstv %s204
    %v206 = vmul.f32 %v83, %v205
    %v207 = vadd.f32 %v203, %v206
    %s208 = sld [smem:[#allocation2 + $0x2c]]
    %v209 = vstv %s208
    %v210 = vmul.f32 %v94, %v209
    %v211 = vadd.f32 %v207, %v210
    %s212 = sld [smem:[#allocation2 + $0x2d]]
    %v213 = vstv %s212
    %v214 = vmul.f32 %v105, %v213
    %v215 = vadd.f32 %v211, %v214
    %s216 = sld [smem:[#allocation2 + $0x2e]]
    %v217 = vstv %s216
    %v218 = vmul.f32 %v116, %v217
    %v219 = vadd.f32 %v215, %v218
    %s220 = sld [smem:[#allocation2 + $0x2f]]
    %v221 = vstv %s220
    %v222 = vmul.f32 %v127, %v221
    %v223 = vadd.f32 %v219, %v222
    %s224 = sld [smem:[#allocation2 + $0x30]]
    %v225 = vstv %s224
    %v226 = vmul.f32 %v138, %v225
    %v227 = vadd.f32 %v223, %v226
    %s228 = sld [smem:[#allocation2 + $0x31]]
    %v229 = vstv %s228
    %v230 = vmul.f32 %v149, %v229
    %v231 = vadd.f32 %v227, %v230
    %s232 = sld [smem:[#allocation2 + $0x83]]
    %v233 = vstv %s232
    %v234 = vadd.f32 %v231, %v233
    %v235 = vmax.f32 %v234, 0.0
    %s236 = sld [smem:[#allocation2 + $0x32]]
    %v237 = vstv %s236
    %v238 = vmul.f32 %v50, %v237
    %s239 = sld [smem:[#allocation2 + $0x33]]
    %v240 = vstv %s239
    %v241 = vmul.f32 %v61, %v240
    %v242 = vadd.f32 %v238, %v241
    %s243 = sld [smem:[#allocation2 + $0x34]]
    %v244 = vstv %s243
    %v245 = vmul.f32 %v72, %v244
    %v246 = vadd.f32 %v242, %v245
    %s247 = sld [smem:[#allocation2 + $0x35]]
    %v248 = vstv %s247
    %v249 = vmul.f32 %v83, %v248
    %v250 = vadd.f32 %v246, %v249
    %s251 = sld [smem:[#allocation2 + $0x36]]
    %v252 = vstv %s251
    %v253 = vmul.f32 %v94, %v252
    %v254 = vadd.f32 %v250, %v253
    %s255 = sld [smem:[#allocation2 + $0x37]]
    %v256 = vstv %s255
    %v257 = vmul.f32 %v105, %v256
    %v258 = vadd.f32 %v254, %v257
    %s259 = sld [smem:[#allocation2 + $0x38]]
    %v260 = vstv %s259
    %v261 = vmul.f32 %v116, %v260
    %v262 = vadd.f32 %v258, %v261
    %s263 = sld [smem:[#allocation2 + $0x39]]
    %v264 = vstv %s263
    %v265 = vmul.f32 %v127, %v264
    %v266 = vadd.f32 %v262, %v265
    %s267 = sld [smem:[#allocation2 + $0x3a]]
    %v268 = vstv %s267
    %v269 = vmul.f32 %v138, %v268
    %v270 = vadd.f32 %v266, %v269
    %s271 = sld [smem:[#allocation2 + $0x3b]]
    %v272 = vstv %s271
    %v273 = vmul.f32 %v149, %v272
    %v274 = vadd.f32 %v270, %v273
    %s275 = sld [smem:[#allocation2 + $0x84]]
    %v276 = vstv %s275
    %v277 = vadd.f32 %v274, %v276
    %v278 = vmax.f32 %v277, 0.0
    %s279 = sld [smem:[#allocation2 + $0x3c]]
    %v280 = vstv %s279
    %v281 = vmul.f32 %v50, %v280
    %s282 = sld [smem:[#allocation2 + $0x3d]]
    %v283 = vstv %s282
    %v284 = vmul.f32 %v61, %v283
    %v285 = vadd.f32 %v281, %v284
    %s286 = sld [smem:[#allocation2 + $0x3e]]
    %v287 = vstv %s286
    %v288 = vmul.f32 %v72, %v287
    %v289 = vadd.f32 %v285, %v288
    %s290 = sld [smem:[#allocation2 + $0x3f]]
    %v291 = vstv %s290
    %v292 = vmul.f32 %v83, %v291
    %v293 = vadd.f32 %v289, %v292
    %s294 = sld [smem:[#allocation2 + $0x40]]
    %v295 = vstv %s294
    %v296 = vmul.f32 %v94, %v295
    %v297 = vadd.f32 %v293, %v296
    %s298 = sld [smem:[#allocation2 + $0x41]]
    %v299 = vstv %s298
    %v300 = vmul.f32 %v105, %v299
    %v301 = vadd.f32 %v297, %v300
    %s302 = sld [smem:[#allocation2 + $0x42]]
    %v303 = vstv %s302
    %v304 = vmul.f32 %v116, %v303
    %v305 = vadd.f32 %v301, %v304
    %s306 = sld [smem:[#allocation2 + $0x43]]
    %v307 = vstv %s306
    %v308 = vmul.f32 %v127, %v307
    %v309 = vadd.f32 %v305, %v308
    %s310 = sld [smem:[#allocation2 + $0x44]]
    %v311 = vstv %s310
    %v312 = vmul.f32 %v138, %v311
    %v313 = vadd.f32 %v309, %v312
    %s314 = sld [smem:[#allocation2 + $0x45]]
    %v315 = vstv %s314
    %v316 = vmul.f32 %v149, %v315
    %v317 = vadd.f32 %v313, %v316
    %s318 = sld [smem:[#allocation2 + $0x85]]
    %v319 = vstv %s318
    %v320 = vadd.f32 %v317, %v319
    %v321 = vmax.f32 %v320, 0.0
    %s322 = sld [smem:[#allocation2 + $0x46]]
    %v323 = vstv %s322
    %v324 = vmul.f32 %v50, %v323
    %s325 = sld [smem:[#allocation2 + $0x47]]
    %v326 = vstv %s325
    %v327 = vmul.f32 %v61, %v326
    %v328 = vadd.f32 %v324, %v327
    %s329 = sld [smem:[#allocation2 + $0x48]]
    %v330 = vstv %s329
    %v331 = vmul.f32 %v72, %v330
    %v332 = vadd.f32 %v328, %v331
    %s333 = sld [smem:[#allocation2 + $0x49]]
    %v334 = vstv %s333
    %v335 = vmul.f32 %v83, %v334
    %v336 = vadd.f32 %v332, %v335
    %s337 = sld [smem:[#allocation2 + $0x4a]]
    %v338 = vstv %s337
    %v339 = vmul.f32 %v94, %v338
    %v340 = vadd.f32 %v336, %v339
    %s341 = sld [smem:[#allocation2 + $0x4b]]
    %v342 = vstv %s341
    %v343 = vmul.f32 %v105, %v342
    %v344 = vadd.f32 %v340, %v343
    %s345 = sld [smem:[#allocation2 + $0x4c]]
    %v346 = vstv %s345
    %v347 = vmul.f32 %v116, %v346
    %v348 = vadd.f32 %v344, %v347
    %s349 = sld [smem:[#allocation2 + $0x4d]]
    %v350 = vstv %s349
    %v351 = vmul.f32 %v127, %v350
    %v352 = vadd.f32 %v348, %v351
    %s353 = sld [smem:[#allocation2 + $0x4e]]
    %v354 = vstv %s353
    %v355 = vmul.f32 %v138, %v354
    %v356 = vadd.f32 %v352, %v355
    %s357 = sld [smem:[#allocation2 + $0x4f]]
    %v358 = vstv %s357
    %v359 = vmul.f32 %v149, %v358
    %v360 = vadd.f32 %v356, %v359
    %s361 = sld [smem:[#allocation2 + $0x86]]
    %v362 = vstv %s361
    %v363 = vadd.f32 %v360, %v362
    %v364 = vmax.f32 %v363, 0.0
    %s365 = sld [smem:[#allocation2 + $0x50]]
    %v366 = vstv %s365
    %v367 = vmul.f32 %v50, %v366
    %s368 = sld [smem:[#allocation2 + $0x51]]
    %v369 = vstv %s368
    %v370 = vmul.f32 %v61, %v369
    %v371 = vadd.f32 %v367, %v370
    %s372 = sld [smem:[#allocation2 + $0x52]]
    %v373 = vstv %s372
    %v374 = vmul.f32 %v72, %v373
    %v375 = vadd.f32 %v371, %v374
    %s376 = sld [smem:[#allocation2 + $0x53]]
    %v377 = vstv %s376
    %v378 = vmul.f32 %v83, %v377
    %v379 = vadd.f32 %v375, %v378
    %s380 = sld [smem:[#allocation2 + $0x54]]
    %v381 = vstv %s380
    %v382 = vmul.f32 %v94, %v381
    %v383 = vadd.f32 %v379, %v382
    %s384 = sld [smem:[#allocation2 + $0x55]]
    %v385 = vstv %s384
    %v386 = vmul.f32 %v105, %v385
    %v387 = vadd.f32 %v383, %v386
    %s388 = sld [smem:[#allocation2 + $0x56]]
    %v389 = vstv %s388
    %v390 = vmul.f32 %v116, %v389
    %v391 = vadd.f32 %v387, %v390
    %s392 = sld [smem:[#allocation2 + $0x57]]
    %v393 = vstv %s392
    %v394 = vmul.f32 %v127, %v393
    %v395 = vadd.f32 %v391, %v394
    %s396 = sld [smem:[#allocation2 + $0x58]]
    %v397 = vstv %s396
    %v398 = vmul.f32 %v138, %v397
    %v399 = vadd.f32 %v395, %v398
    %s400 = sld [smem:[#allocation2 + $0x59]]
    %v401 = vstv %s400
    %v402 = vmul.f32 %v149, %v401
    %v403 = vadd.f32 %v399, %v402
    %s404 = sld [smem:[#allocation2 + $0x87]]
    %v405 = vstv %s404
    %v406 = vadd.f32 %v403, %v405
    %v407 = vmax.f32 %v406, 0.0
    %s408 = sld [smem:[#allocation2 + $0x5a]]
    %v409 = vstv %s408
    %v410 = vmul.f32 %v50, %v409
    %s411 = sld [smem:[#allocation2 + $0x5b]]
    %v412 = vstv %s411
    %v413 = vmul.f32 %v61, %v412
    %v414 = vadd.f32 %v410, %v413
    %s415 = sld [smem:[#allocation2 + $0x5c]]
    %v416 = vstv %s415
    %v417 = vmul.f32 %v72, %v416
    %v418 = vadd.f32 %v414, %v417
    %s419 = sld [smem:[#allocation2 + $0x5d]]
    %v420 = vstv %s419
    %v421 = vmul.f32 %v83, %v420
    %v422 = vadd.f32 %v418, %v421
    %s423 = sld [smem:[#allocation2 + $0x5e]]
    %v424 = vstv %s423
    %v425 = vmul.f32 %v94, %v424
    %v426 = vadd.f32 %v422, %v425
    %s427 = sld [smem:[#allocation2 + $0x5f]]
    %v428 = vstv %s427
    %v429 = vmul.f32 %v105, %v428
    %v430 = vadd.f32 %v426, %v429
    %s431 = sld [smem:[#allocation2 + $0x60]]
    %v432 = vstv %s431
    %v433 = vmul.f32 %v116, %v432
    %v434 = vadd.f32 %v430, %v433
    %s435 = sld [smem:[#allocation2 + $0x61]]
    %v436 = vstv %s435
    %v437 = vmul.f32 %v127, %v436
    %v438 = vadd.f32 %v434, %v437
    %s439 = sld [smem:[#allocation2 + $0x62]]
    %v440 = vstv %s439
    %v441 = vmul.f32 %v138, %v440
    %v442 = vadd.f32 %v438, %v441
    %s443 = sld [smem:[#allocation2 + $0x63]]
    %v444 = vstv %s443
    %v445 = vmul.f32 %v149, %v444
    %v446 = vadd.f32 %v442, %v445
    %s447 = sld [smem:[#allocation2 + $0x88]]
    %v448 = vstv %s447
    %v449 = vadd.f32 %v446, %v448
    %v450 = vmax.f32 %v449, 0.0
    %s451 = sld [smem:[#allocation2 + $0x64]]
    %v452 = vstv %s451
    %v453 = vmul.f32 %v50, %v452
    %s454 = sld [smem:[#allocation2 + $0x65]]
    %v455 = vstv %s454
    %v456 = vmul.f32 %v61, %v455
    %v457 = vadd.f32 %v453, %v456
    %s458 = sld [smem:[#allocation2 + $0x66]]
    %v459 = vstv %s458
    %v460 = vmul.f32 %v72, %v459
    %v461 = vadd.f32 %v457, %v460
    %s462 = sld [smem:[#allocation2 + $0x67]]
    %v463 = vstv %s462
    %v464 = vmul.f32 %v83, %v463
    %v465 = vadd.f32 %v461, %v464
    %s466 = sld [smem:[#allocation2 + $0x68]]
    %v467 = vstv %s466
    %v468 = vmul.f32 %v94, %v467
    %v469 = vadd.f32 %v465, %v468
    %s470 = sld [smem:[#allocation2 + $0x69]]
    %v471 = vstv %s470
    %v472 = vmul.f32 %v105, %v471
    %v473 = vadd.f32 %v469, %v472
    %s474 = sld [smem:[#allocation2 + $0x6a]]
    %v475 = vstv %s474
    %v476 = vmul.f32 %v116, %v475
    %v477 = vadd.f32 %v473, %v476
    %s478 = sld [smem:[#allocation2 + $0x6b]]
    %v479 = vstv %s478
    %v480 = vmul.f32 %v127, %v479
    %v481 = vadd.f32 %v477, %v480
    %s482 = sld [smem:[#allocation2 + $0x6c]]
    %v483 = vstv %s482
    %v484 = vmul.f32 %v138, %v483
    %v485 = vadd.f32 %v481, %v484
    %s486 = sld [smem:[#allocation2 + $0x6d]]
    %v487 = vstv %s486
    %v488 = vmul.f32 %v149, %v487
    %v489 = vadd.f32 %v485, %v488
    %s490 = sld [smem:[#allocation2 + $0x89]]
    %v491 = vstv %s490
    %v492 = vadd.f32 %v489, %v491
    %v493 = vmax.f32 %v492, 0.0
    %s494 = sld [smem:[#allocation2 + $0x6e]]
    %v495 = vstv %s494
    %v496 = vmul.f32 %v50, %v495
    %s497 = sld [smem:[#allocation2 + $0x6f]]
    %v498 = vstv %s497
    %v499 = vmul.f32 %v61, %v498
    %v500 = vadd.f32 %v496, %v499
    %s501 = sld [smem:[#allocation2 + $0x70]]
    %v502 = vstv %s501
    %v503 = vmul.f32 %v72, %v502
    %v504 = vadd.f32 %v500, %v503
    %s505 = sld [smem:[#allocation2 + $0x71]]
    %v506 = vstv %s505
    %v507 = vmul.f32 %v83, %v506
    %v508 = vadd.f32 %v504, %v507
    %s509 = sld [smem:[#allocation2 + $0x72]]
    %v510 = vstv %s509
    %v511 = vmul.f32 %v94, %v510
    %v512 = vadd.f32 %v508, %v511
    %s513 = sld [smem:[#allocation2 + $0x73]]
    %v514 = vstv %s513
    %v515 = vmul.f32 %v105, %v514
    %v516 = vadd.f32 %v512, %v515
    %s517 = sld [smem:[#allocation2 + $0x74]]
    %v518 = vstv %s517
    %v519 = vmul.f32 %v116, %v518
    %v520 = vadd.f32 %v516, %v519
    %s521 = sld [smem:[#allocation2 + $0x75]]
    %v522 = vstv %s521
    %v523 = vmul.f32 %v127, %v522
    %v524 = vadd.f32 %v520, %v523
    %s525 = sld [smem:[#allocation2 + $0x76]]
    %v526 = vstv %s525
    %v527 = vmul.f32 %v138, %v526
    %v528 = vadd.f32 %v524, %v527
    %s529 = sld [smem:[#allocation2 + $0x77]]
    %v530 = vstv %s529
    %v531 = vmul.f32 %v149, %v530
    %v532 = vadd.f32 %v528, %v531
    %s533 = sld [smem:[#allocation2 + $0x8a]]
    %v534 = vstv %s533
    %v535 = vadd.f32 %v532, %v534
    %v536 = vmax.f32 %v535, 0.0
    %s537 = sld [smem:[#allocation2 + $0x78]]
    %v538 = vstv %s537
    %v539 = vmul.f32 %v50, %v538
    %s540 = sld [smem:[#allocation2 + $0x79]]
    %v541 = vstv %s540
    %v542 = vmul.f32 %v61, %v541
    %v543 = vadd.f32 %v539, %v542
    %s544 = sld [smem:[#allocation2 + $0x7a]]
    %v545 = vstv %s544
    %v546 = vmul.f32 %v72, %v545
    %v547 = vadd.f32 %v543, %v546
    %s548 = sld [smem:[#allocation2 + $0x7b]]
    %v549 = vstv %s548
    %v550 = vmul.f32 %v83, %v549
    %v551 = vadd.f32 %v547, %v550
    %s552 = sld [smem:[#allocation2 + $0x7c]]
    %v553 = vstv %s552
    %v554 = vmul.f32 %v94, %v553
    %v555 = vadd.f32 %v551, %v554
    %s556 = sld [smem:[#allocation2 + $0x7d]]
    %v557 = vstv %s556
    %v558 = vmul.f32 %v105, %v557
    %v559 = vadd.f32 %v555, %v558
    %s560 = sld [smem:[#allocation2 + $0x7e]]
    %v561 = vstv %s560
    %v562 = vmul.f32 %v116, %v561
    %v563 = vadd.f32 %v559, %v562
    %s564 = sld [smem:[#allocation2 + $0x7f]]
    %v565 = vstv %s564
    %v566 = vmul.f32 %v127, %v565
    %v567 = vadd.f32 %v563, %v566
    %s568 = sld [smem:[#allocation2 + $0x80]]
    %v569 = vstv %s568
    %v570 = vmul.f32 %v138, %v569
    %v571 = vadd.f32 %v567, %v570
    %s572 = sld [smem:[#allocation2 + $0x81]]
    %v573 = vstv %s572
    %v574 = vmul.f32 %v149, %v573
    %v575 = vadd.f32 %v571, %v574
    %s576 = sld [smem:[#allocation2 + $0x8b]]
    %v577 = vstv %s576
    %v578 = vadd.f32 %v575, %v577
    %v579 = vmax.f32 %v578, 0.0
    %s580 = sld [smem:[#allocation2 + $0x8c]]
    %v581 = vstv %s580
    %v582 = vmul.f32 %v192, %v581
    %s583 = sld [smem:[#allocation2 + $0x8d]]
    %v584 = vstv %s583
    %v585 = vmul.f32 %v235, %v584
    %v586 = vadd.f32 %v582, %v585
    %s587 = sld [smem:[#allocation2 + $0x8e]]
    %v588 = vstv %s587
    %v589 = vmul.f32 %v278, %v588
    %v590 = vadd.f32 %v586, %v589
    %s591 = sld [smem:[#allocation2 + $0x8f]]
    %v592 = vstv %s591
    %v593 = vmul.f32 %v321, %v592
    %v594 = vadd.f32 %v590, %v593
    %s595 = sld [smem:[#allocation2 + $0x90]]
    %v596 = vstv %s595
    %v597 = vmul.f32 %v364, %v596
    %v598 = vadd.f32 %v594, %v597
    %s599 = sld [smem:[#allocation2 + $0x91]]
    %v600 = vstv %s599
    %v601 = vmul.f32 %v407, %v600
    %v602 = vadd.f32 %v598, %v601
    %s603 = sld [smem:[#allocation2 + $0x92]]
    %v604 = vstv %s603
    %v605 = vmul.f32 %v450, %v604
    %v606 = vadd.f32 %v602, %v605
    %s607 = sld [smem:[#allocation2 + $0x93]]
    %v608 = vstv %s607
    %v609 = vmul.f32 %v493, %v608
    %v610 = vadd.f32 %v606, %v609
    %s611 = sld [smem:[#allocation2 + $0x94]]
    %v612 = vstv %s611
    %v613 = vmul.f32 %v536, %v612
    %v614 = vadd.f32 %v610, %v613
    %s615 = sld [smem:[#allocation2 + $0x95]]
    %v616 = vstv %s615
    %v617 = vmul.f32 %v579, %v616
    %v618 = vadd.f32 %v614, %v617
    %s619 = sld [smem:[#allocation2 + $0x96]]
    %v620 = vstv %s619
    %v621 = vadd.f32 %v618, %v620
    %622 = vst [vmem:[#allocation7] sm:$0xff] %v621
    // Predicated region
    $region18: #{tpu_custom_call.1} parent=1 // pred_check
      _
    $region19: #{tpu_custom_call.1} parent=1 // pred_check_branch
      %624 = sbr.rel (0) target = $region21
    $region20: #{tpu_custom_call.1} parent=1 // pred_region
      %s626 = ssub.s32 128, 128
      %627 = vsyncadd [#allocation4], %s626
      %s629 = sshll.u32 [#allocation7], 4
      %s630 = int_to_ptr.vmem [resolvable:$true] %s629
      %632 = dma.vmem_to_hbm [thread:$0]  %s630, 128, %s2, [#allocation4]
    $region21: #{tpu_custom_call.1} parent=1 // pred_fallthru
      _
    // Predicated region
    $region22: #{tpu_custom_call.1} parent=1 // pred_check
      _
    $region23: #{tpu_custom_call.1} parent=1 // pred_check_branch
      %634 = sbr.rel (0) target = $region25
    $region24: #{tpu_custom_call.1} parent=1 // pred_region
      %635 = dma.done [#allocation4], 128
    $region25: #{tpu_custom_call.1} parent=1 // pred_fallthru
      _
    %636 = vsyncpa [#allocation3], 1
    %637 = vsyncpa [#allocation4], 1
    %638 = vsyncpa [#allocation5], 1

</llo_original>
